<compile_context>
chip_gen: v7x
topology: tpu7x:2x2x1
jax: 0.10.0
libtpu: 0.0.40
codegen_flags: <defaults>
</compile_context>

<pallas_src>
import numpy as np
import jax
import jax.numpy as jnp
from jax import lax
from jax.experimental import pallas as pl
from jax.experimental.pallas import tpu as pltpu


def _dft_matrix(n: int):
    """scipy.linalg.dft(n): W[j,k] = exp(-2*pi*i*j*k/n), unnormalized (host f64)."""
    idx = np.arange(n, dtype=np.float64)
    ang = -2.0 * np.pi * np.outer(idx, idx) / n
    return np.cos(ang), np.sin(ang)


def build_dft_params(seq_len: int, hidden_size: int, dtype=jnp.bfloat16):
    """Host-side prep: Re(Ds), -Im(Ds), and [Re(Dh) | Im(Dh)]."""
    ds_re, ds_im = _dft_matrix(seq_len)
    dh_re, dh_im = _dft_matrix(hidden_size)
    return (jnp.asarray(ds_re, dtype=dtype),                              # (S, S)
            jnp.asarray(-ds_im, dtype=dtype),                             # (S, S)
            jnp.asarray(np.concatenate([dh_re, dh_im], axis=1), dtype))   # (H, 2H)


def _fourier_kernel(x_ref, ds_re_ref, ds_nim_ref, dh_cat_ref, o_ref):
    bt, s, h = x_ref.shape
    cdt = dh_cat_ref.dtype
    # f32 debug path: force full-precision MXU passes so the tight tolerance
    # holds. bf16 production path runs at native MXU rate with DEFAULT.
    prec = (lax.Precision.HIGHEST if cdt == jnp.float32
            else lax.Precision.DEFAULT)

    def one_row(b):
        # Stage 1: (S, H) x (H, 2H) -> (S, 2H), f32 accumulation.
        t = jnp.dot(x_ref[b], dh_cat_ref[...],
                    preferred_element_type=jnp.float32, precision=prec)
        t_re = t[:, 0:h].astype(cdt)
        t_im = t[:, h:2 * h].astype(cdt)
        # Stage 2: split-accumulate, no (2S, H) restack scratch / WAR hazard:
        #   out = Re(Ds) @ t_re + (-Im(Ds)) @ t_im
        out_b = jnp.dot(ds_re_ref[...], t_re,
                        preferred_element_type=jnp.float32, precision=prec)
        out_b = out_b + jnp.dot(ds_nim_ref[...], t_im,
                                preferred_element_type=jnp.float32, precision=prec)
        o_ref[b] = out_b.astype(o_ref.dtype)

    if bt <= 2:
        for b in range(bt):            # small static unroll
            one_row(b)
    else:
        def body(b, carry):            # bounds live ranges for larger block_b
            one_row(b)
            return carry
        lax.fori_loop(0, bt, body, 0)


def fourier_mm_layer(hidden_states, ds_re, ds_nim, dh_cat, *,
                     block_b: int = 1,
                     out_dtype=jnp.float32,
                     vmem_limit_bytes: int = 48 * 1024 * 1024):
    """out[b] = Re(DFT_seq @ hidden_states[b] @ DFT_hidden)."""
    B, S, H = hidden_states.shape
    assert ds_re.shape == (S, S) and ds_nim.shape == (S, S)
    assert dh_cat.shape == (H, 2 * H)
    assert B % block_b == 0, "block_b must divide the batch size"
    cdt = dh_cat.dtype
    # Cast in the wrapper (not per grid step in the kernel): halves the x DMA
    # and its VMEM double-buffer when cdt is bf16.
    x = hidden_states.astype(cdt)
    grid = (B // block_b,)
    return pl.pallas_call(
        _fourier_kernel,
        out_shape=jax.ShapeDtypeStruct((B, S, H), out_dtype),
        grid_spec=pltpu.PrefetchScalarGridSpec(
            num_scalar_prefetch=0,
            grid=grid,
            in_specs=[
                pl.BlockSpec((block_b, S, H), lambda i: (i, 0, 0)),  # x block
                pl.BlockSpec((S, S), lambda i: (0, 0)),              # Re(Ds)
                pl.BlockSpec((S, S), lambda i: (0, 0)),              # -Im(Ds)
                pl.BlockSpec((H, 2 * H), lambda i: (0, 0)),          # [Re|Im](Dh)
            ],
            out_specs=pl.BlockSpec((block_b, S, H), lambda i: (i, 0, 0)),
        ),
        compiler_params=pltpu.CompilerParams(
            dimension_semantics=("parallel",),     # batch blocks -> megacore
            vmem_limit_bytes=vmem_limit_bytes,     # 48 MiB: fits v7x, > v5e default
        ),
    )(x, ds_re, ds_nim, dh_cat)


if __name__ == "__main__":
    # Small shapes consistent with the module:
    # (batch, max_position_embeddings, hidden_size).
    B, S, H = 2, 8, 32
    # NOTE: H=32 underfills the 128-wide lane dim; real FNet shapes (H >= 512,
    # S = 512) are lane-dense. Shapes kept small to match the reference module.

    key = jax.random.PRNGKey(0)
    x = jax.random.normal(key, (B, S, H), dtype=jnp.float32)

    # Exact complex128 reference on host.
    ds_re_np, ds_im_np = _dft_matrix(S)
    dh_re_np, dh_im_np = _dft_matrix(H)
    dft_seq = ds_re_np + 1j * ds_im_np
    dft_hid = dh_re_np + 1j * dh_im_np
    x_np = np.asarray(x, dtype=np.float64)
    ref = np.einsum('bij,jk,ni->bnk', x_np.astype(np.complex128),
                    dft_hid, dft_seq).real.astype(np.float32)

    # Production path: bf16 operands / f32 accumulation, block_b=1
    # (grid=(2,) keeps both v7x TensorCores busy).
    ds_re16, ds_nim16, dh_cat16 = build_dft_params(S, H, jnp.bfloat16)
    out16 = jax.block_until_ready(
        fourier_mm_layer(x, ds_re16, ds_nim16, dh_cat16, block_b=1))
    rel_err = (np.max(np.abs(np.asarray(out16, dtype=np.float32) - ref))
               / np.max(np.abs(ref)))
    assert rel_err < 3e-2, f"bf16 path relative error too high: {rel_err}"

    # Debug path: f32 operands (precision=HIGHEST), block_b=2 exercises batch
    # blocking (note: grid=(1,) — only do this on single-TC v5e/v6e).
    ds_re32, ds_nim32, dh_cat32 = build_dft_params(S, H, jnp.float32)
    out32 = jax.block_until_ready(
        fourier_mm_layer(x, ds_re32, ds_nim32, dh_cat32, block_b=2))
    np.testing.assert_allclose(np.asarray(out32), ref, rtol=1e-4, atol=1e-3)

    print("KERNEL_OK")
</pallas_src>

<mosaic_0001>
module attributes {stable_mosaic.version = 11 : i64} {
  func.func @_fourier_kernel(%arg0: i32, %arg1: memref<1x8x32xbf16, #tpu.memory_space<vmem>>, %arg2: memref<8x8xbf16, #tpu.memory_space<vmem>>, %arg3: memref<8x8xbf16, #tpu.memory_space<vmem>>, %arg4: memref<32x64xbf16, #tpu.memory_space<vmem>>, %arg5: memref<1x8x32xf32, #tpu.memory_space<vmem>>) attributes {dimension_semantics = [#tpu.dimension_semantics<parallel>], iteration_bounds = array<i64: 2>, scalar_prefetch = 0 : i64, scratch_operands = 0 : i64, tpu.core_type = #tpu.core_type<tc>, window_params = [{transform_indices = @transform_0, window_bounds = array<i64: 1, 8, 32>}, {pipeline_mode = #tpu.pipeline_mode<synchronous>, transform_indices = @transform_1, window_bounds = array<i64: 8, 8>}, {pipeline_mode = #tpu.pipeline_mode<synchronous>, transform_indices = @transform_2, window_bounds = array<i64: 8, 8>}, {pipeline_mode = #tpu.pipeline_mode<synchronous>, transform_indices = @transform_3, window_bounds = array<i64: 32, 64>}, {transform_indices = @transform_4, window_bounds = array<i64: 1, 8, 32>}]} {
    %c0 = arith.constant 0 : index
    %c0_0 = arith.constant 0 : index
    %c0_1 = arith.constant 0 : index
    %0 = vector.load %arg1[%c0, %c0_0, %c0_1] : memref<1x8x32xbf16, #tpu.memory_space<vmem>>, vector<1x8x32xbf16>
    %1 = vector.shape_cast %0 : vector<1x8x32xbf16> to vector<8x32xbf16>
    %c0_2 = arith.constant 0 : index
    %c0_3 = arith.constant 0 : index
    %2 = vector.load %arg4[%c0_2, %c0_3] : memref<32x64xbf16, #tpu.memory_space<vmem>>, vector<32x64xbf16>
    %cst = arith.constant dense<0.000000e+00> : vector<8x64xf32>
    %3 = tpu.matmul %1, %2, %cst {dimension_numbers = #tpu.dot_dimension_numbers<[1], [0], [0], [1], [0, 0, 1, 1], [], []>} : vector<8x32xbf16>, vector<32x64xbf16>, vector<8x64xf32> -> vector<8x64xf32>
    %4 = vector.extract_strided_slice %3 {offsets = [0, 0], sizes = [8, 32], strides = [1, 1]} : vector<8x64xf32> to vector<8x32xf32>
    %5 = arith.truncf %4 : vector<8x32xf32> to vector<8x32xbf16>
    %6 = vector.extract_strided_slice %3 {offsets = [0, 32], sizes = [8, 32], strides = [1, 1]} : vector<8x64xf32> to vector<8x32xf32>
    %7 = arith.truncf %6 : vector<8x32xf32> to vector<8x32xbf16>
    %c0_4 = arith.constant 0 : index
    %c0_5 = arith.constant 0 : index
    %8 = vector.load %arg2[%c0_4, %c0_5] : memref<8x8xbf16, #tpu.memory_space<vmem>>, vector<8x8xbf16>
    %cst_6 = arith.constant dense<0.000000e+00> : vector<8x32xf32>
    %9 = tpu.matmul %8, %5, %cst_6 {dimension_numbers = #tpu.dot_dimension_numbers<[1], [0], [0], [1], [0, 0, 1, 1], [], []>} : vector<8x8xbf16>, vector<8x32xbf16>, vector<8x32xf32> -> vector<8x32xf32>
    %c0_7 = arith.constant 0 : index
    %c0_8 = arith.constant 0 : index
    %10 = vector.load %arg3[%c0_7, %c0_8] : memref<8x8xbf16, #tpu.memory_space<vmem>>, vector<8x8xbf16>
    %cst_9 = arith.constant dense<0.000000e+00> : vector<8x32xf32>
    %11 = tpu.matmul %10, %7, %cst_9 {dimension_numbers = #tpu.dot_dimension_numbers<[1], [0], [0], [1], [0, 0, 1, 1], [], []>} : vector<8x8xbf16>, vector<8x32xbf16>, vector<8x32xf32> -> vector<8x32xf32>
    %12 = arith.addf %9, %11 : vector<8x32xf32>
    %c0_10 = arith.constant 0 : index
    %c0_11 = arith.constant 0 : index
    %c0_12 = arith.constant 0 : index
    %13 = vector.load %arg5[%c0_10, %c0_11, %c0_12] : memref<1x8x32xf32, #tpu.memory_space<vmem>>, vector<1x8x32xf32>
    %14 = vector.shape_cast %13 : vector<1x8x32xf32> to vector<8x32xf32>
    %15 = vector.shape_cast %12 : vector<8x32xf32> to vector<1x8x32xf32>
    tpu.vector_store %arg5[%c0_10, %c0_11, %c0_12], %15 {strides = array<i32>} : memref<1x8x32xf32, #tpu.memory_space<vmem>>, vector<1x8x32xf32>,
    return
  }
  func.func @transform_0(%arg0: i32) -> (i32, i32, i32) {
    %c0_i32 = arith.constant 0 : i32
    %c0_i32_0 = arith.constant 0 : i32
    %c0_i32_1 = arith.constant 0 : i32
    return %arg0, %c0_i32, %c0_i32_0 : i32, i32, i32
  }
  func.func @transform_1(%arg0: i32) -> (i32, i32) {
    %c0_i32 = arith.constant 0 : i32
    %c0_i32_0 = arith.constant 0 : i32
    %c0_i32_1 = arith.constant 0 : i32
    return %c0_i32, %c0_i32_0 : i32, i32
  }
  func.func @transform_2(%arg0: i32) -> (i32, i32) {
    %c0_i32 = arith.constant 0 : i32
    %c0_i32_0 = arith.constant 0 : i32
    %c0_i32_1 = arith.constant 0 : i32
    return %c0_i32, %c0_i32_0 : i32, i32
  }
  func.func @transform_3(%arg0: i32) -> (i32, i32) {
    %c0_i32 = arith.constant 0 : i32
    %c0_i32_0 = arith.constant 0 : i32
    %c0_i32_1 = arith.constant 0 : i32
    return %c0_i32, %c0_i32_0 : i32, i32
  }
  func.func @transform_4(%arg0: i32) -> (i32, i32, i32) {
    %c0_i32 = arith.constant 0 : i32
    %c0_i32_0 = arith.constant 0 : i32
    %c0_i32_1 = arith.constant 0 : i32
    return %arg0, %c0_i32, %c0_i32_0 : i32, i32, i32
  }
}

</mosaic_0001>

<llo_original>
// kernel: tpu_custom_call.1
$region0: #{tpu_custom_call.1}
  #allocation0 [shape = 'u32[]', space=smem, size = 0x4, offset = 0x4, fixed_abs, tag = 'smem constant byte address 0x4 - core index']
  #allocation1 [shape = 'u32[144,128]{1,0:T(1,128)}', space=vmem, size = 0x12000, scoped, tag = 'internal scratch']
  %s0 = inlined_call_operand.hbm [shape: bf16[2,8,32], index: 0, kind: input, shape index: {}]
  %s1 = inlined_call_operand.hbm [shape: bf16[8,8], index: 1, kind: input, shape index: {}]
  %s2 = inlined_call_operand.vmem [shape: bf16[8,8], index: 2, kind: input, shape index: {}]
  %s3 = inlined_call_operand.hbm [shape: bf16[32,64], index: 3, kind: input, shape index: {}]
  %s4 = inlined_call_operand.hbm [shape: f32[2,8,32], index: 4, kind: output, shape index: {}]
  %s5 = sld [smem:[#allocation0]]
  $region61: #{tpu_custom_call.1} parent=0
    _
  %s7 = ssub.s32 1, %s5
  %s8 = scalar_select 0, %s7, %s5
  $region1: #{tpu_custom_call.1} parent=0
    #allocation2 [shape = 'u8[4096]{0}', space=vmem, size = 0x1000, scoped, tag = 'input window, operand 0']
    #allocation3 [shape = 's32[2]{0}', space=sflag, size = 0x8, scoped, tag = 'scoped memory for tpu_custom_call.1']
    #allocation4 [shape = 's32[2]{0}', space=sflag, size = 0x8, scoped, tag = 'scoped memory for tpu_custom_call.1']
    #allocation5 [shape = 'u8[2048]{0}', space=vmem, size = 0x800, scoped, tag = 'input window, operand 1, single buffered']
    #allocation6 [shape = 's32[1]{0}', space=sflag, size = 0x4, scoped, tag = 'scoped memory for tpu_custom_call.1']
    #allocation7 [shape = 'u8[8192]{0}', space=vmem, size = 0x2000, scoped, tag = 'input window, operand 3, single buffered']
    #allocation8 [shape = 'u8[8192]{0}', space=vmem, size = 0x2000, scoped, tag = 'output window, operand 0']
    %9 = vsyncpa [#allocation3], 0
    %s10 = scalar_lea.sflag [#allocation3], 1
    %11 = vsyncpa %s10, 0
    %12 = vsyncpa [#allocation6], 0
    %13 = vsyncpa [#allocation4], 0
    %s14 = scalar_lea.sflag [#allocation4], 1
    %15 = vsyncpa %s14, 0
    loop: start=0, step=1, limit=4
    $region2: #{tpu_custom_call.1} parent=1 // loop_pre_header
      _
    $region3: #{tpu_custom_call.1} parent=1 // loop_header
      %s17 = sphi 0, %s21
      %p18 = scmp.ge.s32.totalorder %s17, 4
      %s27 = sphi 0, %s29
      %s30 = sphi 0, %s27
      %s31 = sphi 0, %s30
      %s47 = sphi 0, %s31
      %s51 = sphi 0, %s51
      %s53 = sphi 0, %s51
      %s54 = sphi 0, %s53
      %s68 = sphi 0, %s54
      %s72 = sphi 0, %s72
      %s74 = sphi 0, %s72
      %s75 = sphi 0, %s74
      %s89 = sphi 0, %s75
      %s93 = sphi 0, %s93
      %s95 = sphi 0, %s93
      %s96 = sphi 0, %s95
      %s110 = sphi 0, %s96
      %s116 = sphi 0, %s118
      %s119 = sphi 0, %s116
      %s120 = sphi 0, %s119
      %s136 = sphi 0, %s120
    $region4: #{tpu_custom_call.1} parent=1 // loop_header_branch
      %20 = sbr.rel (%p18) target = $region8
    $region5: #{tpu_custom_call.1} parent=1 // loop_body
      %s22 = ssub.s32 %s17, 1
      %s23 = ssub.s32 %s17, 2
      %s24 = sadd.s32 %s17, 1
      %s25 = ssub.s32 %s17, %s24
      %p26 = scmp.eq.s32.totalorder %s25, 0
      %s28 = sadd.s32 %s27, 1
      %s29 = scalar_select %p26, %s27, %s28
      %p32 = pneg %p26
      %p33 = scmp.eq.s32.totalorder %s17, 1
      %p34 = por %p32, %p33
      %p35 = scmp.ne.s32.totalorder %s27, %s30
      %p36 = scmp.eq.s32.totalorder %s17, 0
      %p37 = por %p35, %p36
      %p38 = scmp.ne.s32.totalorder %s27, %s30
      %p39 = scmp.eq.s32.totalorder %s22, 1
      %p40 = por %p38, %p39
      %p41 = scmp.ne.s32.totalorder %s30, %s31
      %p42 = scmp.eq.s32.totalorder %s22, 0
      %p43 = por %p41, %p42
      %p44 = scmp.ne.s32.totalorder %s30, %s31
      %p45 = scmp.eq.s32.totalorder %s23, 1
      %p46 = por %p44, %p45
      %p48 = scmp.ne.s32.totalorder %s31, %s47
      %p49 = scmp.eq.s32.totalorder %s23, 0
      %p50 = por %p48, %p49
      %s52 = sadd.s32 %s51, 1
      %p55 = scmp.eq.s32.totalorder %s17, 1
      %p56 = scmp.ne.s32.totalorder %s51, %s53
      %p57 = scmp.eq.s32.totalorder %s17, 0
      %p58 = por %p56, %p57
      %p59 = scmp.ne.s32.totalorder %s51, %s53
      %p60 = scmp.eq.s32.totalorder %s22, 1
      %p61 = por %p59, %p60
      %p62 = scmp.ne.s32.totalorder %s53, %s54
      %p63 = scmp.eq.s32.totalorder %s22, 0
      %p64 = por %p62, %p63
      %p65 = scmp.ne.s32.totalorder %s53, %s54
      %p66 = scmp.eq.s32.totalorder %s23, 1
      %p67 = por %p65, %p66
      %p69 = scmp.ne.s32.totalorder %s54, %s68
      %p70 = scmp.eq.s32.totalorder %s23, 0
      %p71 = por %p69, %p70
      %s73 = sadd.s32 %s72, 1
      %p76 = scmp.eq.s32.totalorder %s17, 1
      %p77 = scmp.ne.s32.totalorder %s72, %s74
      %p78 = scmp.eq.s32.totalorder %s17, 0
      %p79 = por %p77, %p78
      %p80 = scmp.ne.s32.totalorder %s72, %s74
      %p81 = scmp.eq.s32.totalorder %s22, 1
      %p82 = por %p80, %p81
      %p83 = scmp.ne.s32.totalorder %s74, %s75
      %p84 = scmp.eq.s32.totalorder %s22, 0
      %p85 = por %p83, %p84
      %p86 = scmp.ne.s32.totalorder %s74, %s75
      %p87 = scmp.eq.s32.totalorder %s23, 1
      %p88 = por %p86, %p87
      %p90 = scmp.ne.s32.totalorder %s75, %s89
      %p91 = scmp.eq.s32.totalorder %s23, 0
      %p92 = por %p90, %p91
      %s94 = sadd.s32 %s93, 1
      %p97 = scmp.eq.s32.totalorder %s17, 1
      %p98 = scmp.ne.s32.totalorder %s93, %s95
      %p99 = scmp.eq.s32.totalorder %s17, 0
      %p100 = por %p98, %p99
      %p101 = scmp.ne.s32.totalorder %s93, %s95
      %p102 = scmp.eq.s32.totalorder %s22, 1
      %p103 = por %p101, %p102
      %p104 = scmp.ne.s32.totalorder %s95, %s96
      %p105 = scmp.eq.s32.totalorder %s22, 0
      %p106 = por %p104, %p105
      %p107 = scmp.ne.s32.totalorder %s95, %s96
      %p108 = scmp.eq.s32.totalorder %s23, 1
      %p109 = por %p107, %p108
      %p111 = scmp.ne.s32.totalorder %s96, %s110
      %p112 = scmp.eq.s32.totalorder %s23, 0
      %p113 = por %p111, %p112
      %s114 = ssub.s32 %s17, %s24
      %p115 = scmp.eq.s32.totalorder %s114, 0
      %s117 = sadd.s32 %s116, 1
      %s118 = scalar_select %p115, %s116, %s117
      %p121 = pneg %p115
      %p122 = scmp.eq.s32.totalorder %s17, 1
      %p123 = por %p121, %p122
      %p124 = scmp.ne.s32.totalorder %s116, %s119
      %p125 = scmp.eq.s32.totalorder %s17, 0
      %p126 = por %p124, %p125
      %p127 = scmp.ne.s32.totalorder %s116, %s119
      %p128 = scmp.eq.s32.totalorder %s22, 1
      %p129 = por %p127, %p128
      %p130 = scmp.ne.s32.totalorder %s119, %s120
      %p131 = scmp.eq.s32.totalorder %s22, 0
      %p132 = por %p130, %p131
      %p133 = scmp.ne.s32.totalorder %s119, %s120
      %p134 = scmp.eq.s32.totalorder %s23, 1
      %p135 = por %p133, %p134
      %p137 = scmp.ne.s32.totalorder %s120, %s136
      %p138 = scmp.eq.s32.totalorder %s23, 0
      %p139 = por %p137, %p138
      %p140 = scmp.le.s32.totalorder 1, %s17
      %p141 = scmp.lt.s32.totalorder %s17, 3
      %p142 = pnand %p140, %p141
      %p143 = pneg %p142
      // Predicated region
      $region9: #{tpu_custom_call.1} parent=5 // pred_check
        _
      $region10: #{tpu_custom_call.1} parent=5 // pred_check_branch
        %145 = sbr.rel (%p142) target = $region12
      $region11: #{tpu_custom_call.1} parent=5 // pred_region
        %s146 = ssub.s32 %s17, 1
        // Predicated region
        $region13: #{tpu_custom_call.1} parent=11 // pred_check
          %p147 = pneg %p64
        $region14: #{tpu_custom_call.1} parent=11 // pred_check_branch
          %149 = sbr.rel (%p147) target = $region16
        $region15: #{tpu_custom_call.1} parent=11 // pred_region
          %s151 = ssub.s32 64, 64
          %152 = vsyncadd [#allocation6], %s151
          %s154 = sshll.u32 [#allocation5], 4
          %s155 = int_to_ptr.vmem [resolvable:$true] %s154
          %157 = dma.hbm_to_vmem [thread:$0]  %s1, 64, %s155, [#allocation6]
        $region16: #{tpu_custom_call.1} parent=11 // pred_fallthru
          _
        // Predicated region
        $region17: #{tpu_custom_call.1} parent=11 // pred_check
          %p158 = pneg %p85
        $region18: #{tpu_custom_call.1} parent=11 // pred_check_branch
          %160 = sbr.rel (%p158) target = $region20
        $region19: #{tpu_custom_call.1} parent=11 // pred_region
          _
        $region20: #{tpu_custom_call.1} parent=11 // pred_fallthru
          _
        // Predicated region
        $region21: #{tpu_custom_call.1} parent=11 // pred_check
          %p161 = pneg %p106
        $region22: #{tpu_custom_call.1} parent=11 // pred_check_branch
          %163 = sbr.rel (%p161) target = $region24
        $region23: #{tpu_custom_call.1} parent=11 // pred_region
          %s165 = ssub.s32 256, 256
          %166 = vsyncadd [#allocation6], %s165
          %s167 = sshll.u32 [#allocation7], 4
          %s168 = int_to_ptr.vmem [resolvable:$true] %s167
          %173 = dma.hbm_to_vmem [thread:$0]  %s3, 256, %s168, [#allocation6], 64, 64, 4
        $region24: #{tpu_custom_call.1} parent=11 // pred_fallthru
          _
      $region12: #{tpu_custom_call.1} parent=5 // pred_fallthru
        _
      %p174 = scmp.lt.s32.totalorder %s17, 2
      // Predicated region
      $region25: #{tpu_custom_call.1} parent=5 // pred_check
        %p175 = pneg %p174
      $region26: #{tpu_custom_call.1} parent=5 // pred_check_branch
        %177 = sbr.rel (%p175) target = $region28
      $region27: #{tpu_custom_call.1} parent=5 // pred_region
        // Predicated region
        $region29: #{tpu_custom_call.1} parent=27 // pred_check
          %p178 = pneg %p37
        $region30: #{tpu_custom_call.1} parent=27 // pred_check_branch
          %180 = sbr.rel (%p178) target = $region32
        $region31: #{tpu_custom_call.1} parent=27 // pred_region
          %s181 = sand.u32 %s27, 1
          %s182 = scalar_lea.sflag [#allocation3], %s181
          %s183 = sand.u32 %s27, 1
          %s184 = smul.addr %s183, 4
          %s185 = scalar_lea.vmem [#allocation2], %s184
          %s187 = ssub.s32 64, 64
          %188 = vsyncadd %s182, %s187
          %s189 = smul.addr %s17, 64
          %s190 = scalar_lea.hbm %s0, %s189
          %s192 = sshll.u32 %s185, 4
          %s193 = int_to_ptr.vmem [resolvable:$true] %s192
          %195 = dma.hbm_to_vmem [thread:$0]  %s190, 64, %s193, %s182
        $region32: #{tpu_custom_call.1} parent=27 // pred_fallthru
          _
      $region28: #{tpu_custom_call.1} parent=5 // pred_fallthru
        _
      %p196 = scmp.le.s32.totalorder 1, %s17
      %p197 = scmp.lt.s32.totalorder %s17, 3
      %p198 = pnand %p196, %p197
      %p199 = pneg %p198
      // Predicated region
      $region33: #{tpu_custom_call.1} parent=5 // pred_check
        _
      $region34: #{tpu_custom_call.1} parent=5 // pred_check_branch
        %201 = sbr.rel (%p198) target = $region36
      $region35: #{tpu_custom_call.1} parent=5 // pred_region
        %s202 = ssub.s32 %s17, 1
        %s203 = sand.u32 %s30, 1
        %s204 = scalar_lea.sflag [#allocation3], %s203
        %s205 = sand.u32 %s30, 1
        %s206 = smul.addr %s205, 4
        %s207 = scalar_lea.vmem [#allocation2], %s206
        // Predicated region
        $region37: #{tpu_custom_call.1} parent=35 // pred_check
          %p208 = pneg %p43
        $region38: #{tpu_custom_call.1} parent=35 // pred_check_branch
          %210 = sbr.rel (%p208) target = $region40
        $region39: #{tpu_custom_call.1} parent=35 // pred_region
          %211 = dma.done %s204, 64
        $region40: #{tpu_custom_call.1} parent=35 // pred_fallthru
          _
        // Predicated region
        $region41: #{tpu_custom_call.1} parent=35 // pred_check
          %p212 = pneg %p64
        $region42: #{tpu_custom_call.1} parent=35 // pred_check_branch
          %214 = sbr.rel (%p212) target = $region44
        $region43: #{tpu_custom_call.1} parent=35 // pred_region
          %215 = dma.done [#allocation6], 64
        $region44: #{tpu_custom_call.1} parent=35 // pred_fallthru
          _
        // Predicated region
        $region45: #{tpu_custom_call.1} parent=35 // pred_check
          %p216 = pneg %p106
        $region46: #{tpu_custom_call.1} parent=35 // pred_check_branch
          %218 = sbr.rel (%p216) target = $region48
        $region47: #{tpu_custom_call.1} parent=35 // pred_region
          %219 = dma.done [#allocation6], 256
        $region48: #{tpu_custom_call.1} parent=35 // pred_fallthru
          _
        %s220 = sand.u32 %s30, 1
        %s221 = scalar_lea.sflag [#allocation3], %s220
        %s222 = sand.u32 %s30, 1
        %s223 = smul.addr %s222, 4
        %s224 = scalar_lea.vmem [#allocation2], %s223
        %p225 = pneg %p43
        %p226 = pneg %p40
        %p227 = pneg %p64
        %p228 = pneg %p61
        %p229 = pneg %p85
        %p230 = pneg %p82
        %p231 = pneg %p106
        %p232 = pneg %p103
        %p233 = pneg %p132
        %p234 = pneg %p129
        %s235 = sand.u32 %s119, 1
        %s236 = scalar_lea.sflag [#allocation4], %s235
        %s237 = sand.u32 %s119, 1
        %s238 = smul.addr %s237, 8
        %s239 = scalar_lea.vmem [#allocation8], %s238
        %v241 = vld [vmem:[%s207] sm:$0xf]
        %v242 = vld [vmem:[#allocation7] sm:$0xf]
        %v243 = vld [vmem:[#allocation7 + $0x4] sm:$0xf]
        %v244 = vld [vmem:[#allocation7 + $0x8] sm:$0xf]
        %v245 = vld [vmem:[#allocation7 + $0xc] sm:$0xf]
        %v250 = vunpack.c.l.b16 %v242
        %v251 = vunpack.c.l.b16 %v243
        %v252 = vunpack.c.l.b16 %v244
        %v253 = vunpack.c.l.b16 %v245
        %v254 = vpack.c.b16 %v251, %v250
        %v255 = vpack.c.b16 %v253, %v252
        %vm258 = vcmask 261120
        %v260 = vsel %vm258, %v241, 0
        %262 = vmatprep.subr.bf16.mxu0 0
        %263 = vmatpush1.bf16.msra.mxu0 %v254
        %264 = vmatprep.subr.bf16.mxu0 0
        %265 = vmatpush1.bf16.msra.mxu0 %v255
        %266 = vmatprep.subr.bf16.mxu0 0
        %267 = vmatpush1.bf16.msra.mxu0 0
        %268 = vmatprep.subr.bf16.mxu0 0
        %269 = vmatpush1.bf16.msra.mxu0 0
        %270 = vmatprep.subr.bf16.mxu0 0
        %271 = vmatpush1.bf16.msra.mxu0 0
        %272 = vmatprep.subr.bf16.mxu0 0
        %273 = vmatpush1.bf16.msra.mxu0 0
        %274 = vmatprep.subr.bf16.mxu0 0
        %275 = vmatpush1.bf16.msra.mxu0 0
        %276 = vmatprep.subr.bf16.mxu0 0
        %277 = vmatpush1.bf16.msra.mxu0 0
        %278 = vmatprep.subr.bf16.mxu0 0
        %279 = vmatpush1.bf16.msra.mxu0 0
        %280 = vmatprep.subr.bf16.mxu0 0
        %281 = vmatpush1.bf16.msra.mxu0 0
        %282 = vmatprep.subr.bf16.mxu0 0
        %283 = vmatpush1.bf16.msra.mxu0 0
        %284 = vmatprep.subr.bf16.mxu0 0
        %285 = vmatpush1.bf16.msra.mxu0 0
        %286 = vmatprep.subr.bf16.mxu0 0
        %287 = vmatpush1.bf16.msra.mxu0 0
        %288 = vmatprep.subr.bf16.mxu0 0
        %289 = vmatpush1.bf16.msra.mxu0 0
        %290 = vmatprep.subr.bf16.mxu0 0
        %291 = vmatpush1.bf16.msra.mxu0 0
        %292 = vmatprep.subr.bf16.mxu0 0
        %293 = vmatpush1.bf16.msra.mxu0 0
        %294 = vmatprep.mubr.bf16.mxu0 0
        %295 = vmatmul.mubr.bf16.gmra.mrb[0].mxu0 %v260
        %v296 = vpop.f32.mrb[0].mxu0
        %v297 = vadd.f32 0.0, %v296
        %v298 = vpop.f32.mrb[0].mxu0
        %v299 = vpop.f32.mrb[0].mxu0
        %v300 = vpop.f32.mrb[0].mxu0
        %301 = vdwg.mxu0
        %v302 = vpack.c.bf16 %v297, %v297
        %v303 = vld [vmem:[#allocation5] sm:$0xf]
        %v304 = vld [vmem:[%s2] sm:$0xf]
        %306 = vrot.lane.b32.xlu0 %v302, 96
        %v307 = vpop.permute.xlu0 %306
        %vm308 = vcmask 64512
        %v310 = vsel %vm308, %v304, 0
        %vm312 = vcmask 1043456
        %v314 = vsel %vm312, %v307, 0
        %316 = vmatprep.subr.bf16.mxu0 0
        %317 = vmatpush1.bf16.msra.mxu0 %v314
        %318 = vmatprep.subr.bf16.mxu0 0
        %319 = vmatpush1.bf16.msra.mxu0 0
        %320 = vmatprep.subr.bf16.mxu0 0
        %321 = vmatpush1.bf16.msra.mxu0 0
        %322 = vmatprep.subr.bf16.mxu0 0
        %323 = vmatpush1.bf16.msra.mxu0 0
        %324 = vmatprep.subr.bf16.mxu0 0
        %325 = vmatpush1.bf16.msra.mxu0 0
        %326 = vmatprep.subr.bf16.mxu0 0
        %327 = vmatpush1.bf16.msra.mxu0 0
        %328 = vmatprep.subr.bf16.mxu0 0
        %329 = vmatpush1.bf16.msra.mxu0 0
        %330 = vmatprep.subr.bf16.mxu0 0
        %331 = vmatpush1.bf16.msra.mxu0 0
        %332 = vmatprep.subr.bf16.mxu0 0
        %333 = vmatpush1.bf16.msra.mxu0 0
        %334 = vmatprep.subr.bf16.mxu0 0
        %335 = vmatpush1.bf16.msra.mxu0 0
        %336 = vmatprep.subr.bf16.mxu0 0
        %337 = vmatpush1.bf16.msra.mxu0 0
        %338 = vmatprep.subr.bf16.mxu0 0
        %339 = vmatpush1.bf16.msra.mxu0 0
        %340 = vmatprep.subr.bf16.mxu0 0
        %341 = vmatpush1.bf16.msra.mxu0 0
        %342 = vmatprep.subr.bf16.mxu0 0
        %343 = vmatpush1.bf16.msra.mxu0 0
        %344 = vmatprep.subr.bf16.mxu0 0
        %345 = vmatpush1.bf16.msra.mxu0 0
        %346 = vmatprep.subr.bf16.mxu0 0
        %347 = vmatpush1.bf16.msra.mxu0 0
        %348 = vmatprep.mubr.bf16.mxu0 0
        %349 = vmatmul.mubr.bf16.gmra.mrb[0].mxu0 %v310
        %v350 = vpop.f32.mrb[0].mxu0
        %v351 = vadd.f32 0.0, %v350
        %v352 = vpop.f32.mrb[0].mxu0
        %v353 = vpop.f32.mrb[0].mxu0
        %v354 = vpop.f32.mrb[0].mxu0
        %355 = vdwg.mxu0
        %v357 = vsel %vm308, %v303, 0
        %v360 = vsel %vm312, %v302, 0
        %362 = vmatprep.subr.bf16.mxu0 0
        %363 = vmatpush1.bf16.msra.mxu0 %v360
        %364 = vmatprep.subr.bf16.mxu0 0
        %365 = vmatpush1.bf16.msra.mxu0 0
        %366 = vmatprep.subr.bf16.mxu0 0
        %367 = vmatpush1.bf16.msra.mxu0 0
        %368 = vmatprep.subr.bf16.mxu0 0
        %369 = vmatpush1.bf16.msra.mxu0 0
        %370 = vmatprep.subr.bf16.mxu0 0
        %371 = vmatpush1.bf16.msra.mxu0 0
        %372 = vmatprep.subr.bf16.mxu0 0
        %373 = vmatpush1.bf16.msra.mxu0 0
        %374 = vmatprep.subr.bf16.mxu0 0
        %375 = vmatpush1.bf16.msra.mxu0 0
        %376 = vmatprep.subr.bf16.mxu0 0
        %377 = vmatpush1.bf16.msra.mxu0 0
        %378 = vmatprep.subr.bf16.mxu0 0
        %379 = vmatpush1.bf16.msra.mxu0 0
        %380 = vmatprep.subr.bf16.mxu0 0
        %381 = vmatpush1.bf16.msra.mxu0 0
        %382 = vmatprep.subr.bf16.mxu0 0
        %383 = vmatpush1.bf16.msra.mxu0 0
        %384 = vmatprep.subr.bf16.mxu0 0
        %385 = vmatpush1.bf16.msra.mxu0 0
        %386 = vmatprep.subr.bf16.mxu0 0
        %387 = vmatpush1.bf16.msra.mxu0 0
        %388 = vmatprep.subr.bf16.mxu0 0
        %389 = vmatpush1.bf16.msra.mxu0 0
        %390 = vmatprep.subr.bf16.mxu0 0
        %391 = vmatpush1.bf16.msra.mxu0 0
        %392 = vmatprep.subr.bf16.mxu0 0
        %393 = vmatpush1.bf16.msra.mxu0 0
        %394 = vmatprep.mubr.bf16.mxu0 0
        %395 = vmatmul.mubr.bf16.gmra.mrb[0].mxu0 %v357
        %v396 = vpop.f32.mrb[0].mxu0
        %v397 = vadd.f32 %v351, %v396
        %v398 = vpop.f32.mrb[0].mxu0
        %v399 = vpop.f32.mrb[0].mxu0
        %v400 = vpop.f32.mrb[0].mxu0
        %401 = vdwg.mxu0
        %402 = vst.msk [vmem:[%s239] sm:$0xff] %vm258, %v397
        %s403 = sand.u32 %s119, 1
        %s404 = scalar_lea.sflag [#allocation4], %s403
        %s405 = sand.u32 %s119, 1
        %s406 = smul.addr %s405, 8
        %s407 = scalar_lea.vmem [#allocation8], %s406
        // Predicated region
        $region49: #{tpu_custom_call.1} parent=35 // pred_check
          %p408 = pneg %p129
        $region50: #{tpu_custom_call.1} parent=35 // pred_check_branch
          %410 = sbr.rel (%p408) target = $region52
        $region51: #{tpu_custom_call.1} parent=35 // pred_region
          %s412 = ssub.s32 128, 128
          %413 = vsyncadd %s404, %s412
          %s414 = smul.addr %s22, 128
          %s415 = scalar_lea.hbm %s4, %s414
          %s417 = sshll.u32 %s407, 4
          %s418 = int_to_ptr.vmem [resolvable:$true] %s417
          %420 = dma.vmem_to_hbm [thread:$0]  %s418, 128, %s415, %s404
        $region52: #{tpu_custom_call.1} parent=35 // pred_fallthru
          _
      $region36: #{tpu_custom_call.1} parent=5 // pred_fallthru
        _
      %p421 = scmp.le.s32.totalorder 2, %s17
      // Predicated region
      $region53: #{tpu_custom_call.1} parent=5 // pred_check
        %p422 = pneg %p421
      $region54: #{tpu_custom_call.1} parent=5 // pred_check_branch
        %424 = sbr.rel (%p422) target = $region56
      $region55: #{tpu_custom_call.1} parent=5 // pred_region
        %s425 = ssub.s32 %s17, 2
        // Predicated region
        $region57: #{tpu_custom_call.1} parent=55 // pred_check
          %p426 = pneg %p135
        $region58: #{tpu_custom_call.1} parent=55 // pred_check_branch
          %428 = sbr.rel (%p426) target = $region60
        $region59: #{tpu_custom_call.1} parent=55 // pred_region
          %s429 = sand.u32 %s120, 1
          %s430 = scalar_lea.sflag [#allocation4], %s429
          %s431 = sand.u32 %s120, 1
          %s432 = smul.addr %s431, 8
          %s433 = scalar_lea.vmem [#allocation8], %s432
          %434 = dma.done %s430, 128
        $region60: #{tpu_custom_call.1} parent=55 // pred_fallthru
          _
      $region56: #{tpu_custom_call.1} parent=5 // pred_fallthru
        _
    $region6: #{tpu_custom_call.1} parent=1 // loop_footer
      %s21 = sadd.s32 1, %s17
    $region7: #{tpu_custom_call.1} parent=1 // loop_footer_branch
      %16 = sbr.rel target = $region3
    $region8: #{tpu_custom_call.1} parent=1 // loop_exit
      _
    %435 = vsyncpa [#allocation3], 1
    %s436 = scalar_lea.sflag [#allocation3], 1
    %437 = vsyncpa %s436, 1
    %438 = vsyncpa [#allocation6], 1
    %439 = vsyncpa [#allocation4], 1
    %s440 = scalar_lea.sflag [#allocation4], 1
    %441 = vsyncpa %s440, 1

</llo_original>
